<compile_context>
chip_gen: v7x
topology: tpu7x:2x2x1
jax: 0.10.0
libtpu: 0.0.40
codegen_flags: <defaults>
</compile_context>

<pallas_src>
import jax
import jax.numpy as jnp
from jax.experimental import pallas as pl
from jax.experimental.pallas import tpu as pltpu


def _identity_kernel(x_ref, o_ref):
    # Straight-through: output = input (elementwise copy of the tile).
    o_ref[...] = x_ref[...]


def _tile_bytes_and_num_tc():
    """Per-generation streaming-tile size and TensorCore count (safe fallback)."""
    try:
        kind = jax.devices()[0].device_kind.lower()
    except Exception:  # pragma: no cover - defensive
        kind = ""
    if "v7" in kind or "7x" in kind:
        # v7x: 3.2 TB/s HBM, 32 MiB default scoped VMEM -> 6 MiB tiles
        # (in+out, double-buffered = 24 MiB) and 2 TCs to share the grid.
        return 6 * 1024 * 1024, 2
    if "v6" in kind:
        # v6e: 32 MiB scoped VMEM -> 4 MiB tiles (16 MiB total buffering).
        return 4 * 1024 * 1024, 1
    if "v5" in kind:
        # v5e: only 16 MiB default scoped VMEM -> stay at 2 MiB tiles (8 MiB).
        return 2 * 1024 * 1024, 1
    # Unknown / CPU-interpret fallback: conservative.
    return 2 * 1024 * 1024, 1


def _copy_2d(slab: jax.Array, *, alias_input_to_output: bool = False) -> jax.Array:
    """Streaming identity copy of a lane-dense [rows, lanes] slab."""
    rows, lanes = slab.shape
    itemsize = slab.dtype.itemsize
    bytes_per_row = lanes * itemsize

    tile_bytes, num_tc = _tile_bytes_and_num_tc()

    tr = max(1, tile_bytes // bytes_per_row)
    if tr >= rows:
        tr = rows  # single full-extent block (always legal)
        # v7x has 2 TCs: a 1-step grid pins the copy to one core; split when
        # the slab is big enough that both halves stay 32-row aligned.
        if num_tc >= 2 and rows >= 64:
            half = ((pl.cdiv(rows, 2) + 31) // 32) * 32
            if half < rows:
                tr = half
    else:
        # 32-row alignment keeps stores unmasked for f32/bf16/int8 packing.
        tr = max(32, (tr // 32) * 32)

    grid = (pl.cdiv(rows, tr),)  # ragged last block handled by Pallas

    return pl.pallas_call(
        _identity_kernel,
        out_shape=jax.ShapeDtypeStruct((rows, lanes), slab.dtype),
        grid_spec=pltpu.PrefetchScalarGridSpec(
            num_scalar_prefetch=0,
            grid=grid,
            in_specs=[pl.BlockSpec((tr, lanes), lambda i: (i, 0))],
            out_specs=pl.BlockSpec((tr, lanes), lambda i: (i, 0)),
        ),
        compiler_params=pltpu.CompilerParams(
            dimension_semantics=("parallel",),
        ),
        # Pure-bandwidth custom call: 0 flops, read N + write N bytes.
        cost_estimate=pl.CostEstimate(
            flops=0,
            transcendentals=0,
            bytes_accessed=2 * rows * lanes * itemsize,
        ),
        input_output_aliases=({0: 0} if alias_input_to_output else {}),
    )(slab)


def straight_through(
    x: jax.Array,
    *,
    short_circuit: bool = False,
    alias_input_to_output: bool = False,
) -> jax.Array:
    """Pallas implementation of StraightThrough.forward (identity).

    short_circuit=True returns `x` untouched (zero HBM traffic) — the
    recommended production path for a pure identity.  With it False, a
    streaming Pallas copy is performed (useful as a standalone op / for
    benchmarking).  `alias_input_to_output=True` only pays off when the
    input is donated at a jit boundary; otherwise XLA inserts a defensive
    copy, so it is off by default here.
    """
    if short_circuit:
        return x

    orig_shape = x.shape
    total = x.size
    if total == 0:
        return x

    # Pick the widest lane count (multiple of 128, up to 4096) that divides
    # the flat element count so no padding is needed.
    lanes = None
    for cand in (4096, 2048, 1024, 512, 256, 128):
        if total % cand == 0:
            lanes = cand
            break

    if lanes is not None:
        slab = x.reshape(total // lanes, lanes)
        out = _copy_2d(slab, alias_input_to_output=alias_input_to_output)
        return out.reshape(orig_shape)

    # Rare ragged case (element count not a multiple of 128): stream the
    # 128-aligned prefix through the kernel and handle the <128-element tail
    # with a trivial jnp copy (no full-tensor pad/slice passes).
    lanes = 128
    flat = x.reshape(-1)
    prefix_elems = (total // lanes) * lanes
    if prefix_elems == 0:
        return x  # tiny tensor: identity, nothing worth a kernel launch
    prefix = _copy_2d(
        flat[:prefix_elems].reshape(prefix_elems // lanes, lanes)
    ).reshape(-1)
    tail = flat[prefix_elems:]
    # TODO(synk): reassembly via concatenate adds one extra pass over the
    # prefix; a production identity op would simply return `x` here.
    return jnp.concatenate([prefix, tail]).reshape(orig_shape)


if __name__ == "__main__":
    key = jax.random.PRNGKey(0)
    # Shapes consistent with a conv-style NCHW activation tensor.
    x = jax.random.normal(key, (2, 4, 16, 16), dtype=jnp.float32)

    y = straight_through(x)
    y = jax.block_until_ready(y)

    assert y.shape == x.shape
    assert y.dtype == x.dtype
    assert bool(jnp.all(y == x))

    print("KERNEL_OK")
</pallas_src>

<mosaic_0001>
module attributes {stable_mosaic.version = 11 : i64} {
  func.func @_identity_kernel(%arg0: i32, %arg1: memref<1x2048xf32, #tpu.memory_space<vmem>>, %arg2: memref<1x2048xf32, #tpu.memory_space<vmem>>) attributes {dimension_semantics = [#tpu.dimension_semantics<parallel>], iteration_bounds = array<i64: 1>, scalar_prefetch = 0 : i64, scratch_operands = 0 : i64, tpu.core_type = #tpu.core_type<tc>, window_params = [{transform_indices = @transform_0, window_bounds = array<i64: 1, 2048>}, {transform_indices = @transform_1, window_bounds = array<i64: 1, 2048>}]} {
    %c0 = arith.constant 0 : index
    %c0_0 = arith.constant 0 : index
    %0 = vector.load %arg1[%c0, %c0_0] : memref<1x2048xf32, #tpu.memory_space<vmem>>, vector<1x2048xf32>
    %c0_1 = arith.constant 0 : index
    %c0_2 = arith.constant 0 : index
    %1 = vector.load %arg2[%c0_1, %c0_2] : memref<1x2048xf32, #tpu.memory_space<vmem>>, vector<1x2048xf32>
    tpu.vector_store %arg2[%c0_1, %c0_2], %0 {strides = array<i32>} : memref<1x2048xf32, #tpu.memory_space<vmem>>, vector<1x2048xf32>,
    return
  }
  func.func @transform_0(%arg0: i32) -> (i32, i32) {
    %c0_i32 = arith.constant 0 : i32
    %c0_i32_0 = arith.constant 0 : i32
    return %arg0, %c0_i32 : i32, i32
  }
  func.func @transform_1(%arg0: i32) -> (i32, i32) {
    %c0_i32 = arith.constant 0 : i32
    %c0_i32_0 = arith.constant 0 : i32
    return %arg0, %c0_i32 : i32, i32
  }
}

</mosaic_0001>

<llo_original>
// kernel: tpu_custom_call.1
$region0: #{tpu_custom_call.1}
  #allocation0 [shape = 'u32[]', space=smem, size = 0x4, offset = 0x4, fixed_abs, tag = 'smem constant byte address 0x4 - core index']
  #allocation1 [shape = 'u32[144,128]{1,0:T(1,128)}', space=vmem, size = 0x12000, scoped, tag = 'internal scratch']
  %s0 = inlined_call_operand.hbm [shape: f32[1,2048], index: 0, kind: input, shape index: {}]
  %s1 = inlined_call_operand.hbm [shape: f32[1,2048], index: 1, kind: output, shape index: {}]
  %s2 = sld [smem:[#allocation0]]
  $region18: #{tpu_custom_call.1} parent=0
    _
  %s4 = ssub.s32 1, %s2
  %s5 = scalar_select 0, %s4, %s2
  $region1: #{tpu_custom_call.1} parent=0
    #allocation2 [shape = 'u8[8192]{0}', space=vmem, size = 0x2000, scoped, tag = 'input window, operand 0, single buffered']
    #allocation3 [shape = 's32[1]{0}', space=sflag, size = 0x4, scoped, tag = 'scoped memory for tpu_custom_call.1']
    #allocation4 [shape = 's32[1]{0}', space=sflag, size = 0x4, scoped, tag = 'scoped memory for tpu_custom_call.1']
    #allocation5 [shape = 'u8[8192]{0}', space=vmem, size = 0x2000, scoped, tag = 'output window, operand 0, single buffered']
    %6 = vsyncpa [#allocation3], 0
    %7 = vsyncpa [#allocation4], 0
    // Predicated region
    $region2: #{tpu_custom_call.1} parent=1 // pred_check
      _
    $region3: #{tpu_custom_call.1} parent=1 // pred_check_branch
      %9 = sbr.rel (0) target = $region5
    $region4: #{tpu_custom_call.1} parent=1 // pred_region
      %s11 = ssub.s32 256, 256
      %12 = vsyncadd [#allocation3], %s11
      %s14 = sshll.u32 [#allocation2], 4
      %s15 = int_to_ptr.vmem [resolvable:$true] %s14
      %17 = dma.hbm_to_vmem [thread:$0]  %s0, 256, %s15, [#allocation3]
    $region5: #{tpu_custom_call.1} parent=1 // pred_fallthru
      _
    // Predicated region
    $region6: #{tpu_custom_call.1} parent=1 // pred_check
      _
    $region7: #{tpu_custom_call.1} parent=1 // pred_check_branch
      %19 = sbr.rel (0) target = $region9
    $region8: #{tpu_custom_call.1} parent=1 // pred_region
      %20 = dma.done [#allocation3], 256
    $region9: #{tpu_custom_call.1} parent=1 // pred_fallthru
      _
    %v21 = vld [vmem:[#allocation2] sm:$0xff]
    %v22 = vld [vmem:[#allocation2 + $0x8] sm:$0xff]
    %23 = vst [vmem:[#allocation5] sm:$0xff] %v21
    %24 = vst [vmem:[#allocation5 + $0x8] sm:$0xff] %v22
    // Predicated region
    $region10: #{tpu_custom_call.1} parent=1 // pred_check
      _
    $region11: #{tpu_custom_call.1} parent=1 // pred_check_branch
      %26 = sbr.rel (0) target = $region13
    $region12: #{tpu_custom_call.1} parent=1 // pred_region
      %s28 = ssub.s32 256, 256
      %29 = vsyncadd [#allocation4], %s28
      %s31 = sshll.u32 [#allocation5], 4
      %s32 = int_to_ptr.vmem [resolvable:$true] %s31
      %34 = dma.vmem_to_hbm [thread:$0]  %s32, 256, %s1, [#allocation4]
    $region13: #{tpu_custom_call.1} parent=1 // pred_fallthru
      _
    // Predicated region
    $region14: #{tpu_custom_call.1} parent=1 // pred_check
      _
    $region15: #{tpu_custom_call.1} parent=1 // pred_check_branch
      %36 = sbr.rel (0) target = $region17
    $region16: #{tpu_custom_call.1} parent=1 // pred_region
      %37 = dma.done [#allocation4], 256
    $region17: #{tpu_custom_call.1} parent=1 // pred_fallthru
      _
    %38 = vsyncpa [#allocation3], 1
    %39 = vsyncpa [#allocation4], 1

</llo_original>
